<compile_context>
chip_gen: v7x
topology: tpu7x:2x2x1
jax: 0.10.0
libtpu: 0.0.40
codegen_flags: <defaults>
</compile_context>

<pallas_src>
import jax
import jax.numpy as jnp
from jax.experimental import pallas as pl
from jax.experimental.pallas import tpu as pltpu

LANES = 128
SUBLANES = 8


def affine_tanh_kernel(w_ref, b_ref, x_ref, o_ref):
    # w_ref, b_ref: (1,) scalars in SMEM.  x_ref / o_ref: (tile_rows, 128) VMEM.
    o_ref[...] = jnp.tanh(x_ref[...] * w_ref[0] + b_ref[0])


def _round_up(a, b):
    return ((a + b - 1) // b) * b


def conv1x1_pad_tanh(x_nchw, weight, bias, padding=1,
                     max_tile_rows=4096, min_pallas_elems=1 << 18):
    """1x1 conv (Cin = Cout = 1) with zero spatial padding, then tanh."""
    N, Cin, H, W = x_nchw.shape
    Cout = weight.shape[0]
    assert Cin == 1 and Cout == 1, "kernel specialized for Conv2d(1, 1, 1)"
    # TODO(synk): general Conv2d(m, s, 1) needs a (P,Cin)x(Cin,Cout) MXU path.

    w_arr = weight.reshape(1).astype(jnp.float32)   # (1,) scalar -> SMEM
    b_arr = bias.reshape(1).astype(jnp.float32)     # (1,) scalar -> SMEM
    # Border pixels see only zero input => conv output == bias => tanh(bias).
    border_val = jnp.tanh(b_arr[0])
    pad_cfg = ((0, 0, 0), (0, 0, 0),
               (padding, padding, 0), (padding, padding, 0))

    P = N * H * W

    # Tiny inputs: XLA fusion already optimal; skip the pallas_call overhead.
    if P < min_pallas_elems:
        interior = jnp.tanh(x_nchw.astype(jnp.float32) * w_arr[0] + b_arr[0])
        interior = interior.reshape(N, Cout, H, W)
        return jax.lax.pad(interior, border_val, pad_cfg)

    # Lane-dense slab: flatten interior pixels, last dim = 128 lanes.
    # (C == 1, so NCHW flatten order == NHWC flatten order; no transpose.)
    rows = _round_up(pl.cdiv(P, LANES), SUBLANES)     # sublane-aligned row count
    P_slab = rows * LANES                             # <= P + 1023 elements

    x_flat = x_nchw.reshape(-1).astype(jnp.float32)
    if P_slab != P:
        x_flat = jnp.pad(x_flat, (0, P_slab - P))     # tiny pad; skipped if aligned
    x_slab = x_flat.reshape(rows, LANES)

    # Tile rows: multiple of 8 sublanes; target >= 4 blocks at scale (v7x has
    # 2 TCs and "parallel" only shards when grid > 1); cap at 4096 rows
    # (2 MiB/block => ~8 MiB double-buffered in+out, safe for v5e's 16 MiB
    # default scoped VMEM, big enough to amortize per-step overhead on v7x).
    tile_rows = max(SUBLANES, _round_up(pl.cdiv(rows, 4), SUBLANES))
    tile_rows = min(tile_rows, max_tile_rows)
    grid = pl.cdiv(rows, tile_rows)                   # ragged last block is masked

    out_slab = pl.pallas_call(
        affine_tanh_kernel,
        out_shape=jax.ShapeDtypeStruct((rows, LANES), jnp.float32),
        grid_spec=pltpu.PrefetchScalarGridSpec(
            num_scalar_prefetch=0,
            grid=(grid,),
            in_specs=[
                pl.BlockSpec(memory_space=pltpu.MemorySpace.SMEM),  # weight
                pl.BlockSpec(memory_space=pltpu.MemorySpace.SMEM),  # bias
                pl.BlockSpec((tile_rows, LANES), lambda i: (i, 0)),
            ],
            out_specs=pl.BlockSpec((tile_rows, LANES), lambda i: (i, 0)),
        ),
        compiler_params=pltpu.CompilerParams(
            dimension_semantics=("parallel",)),       # megacore-shardable
    )(w_arr, b_arr, x_slab)

    interior = out_slab.reshape(-1)[:P].reshape(N, Cout, H, W)
    # Single-pass border assembly (replaces jnp.full + .at[].set two-pass).
    return jax.lax.pad(interior, border_val, pad_cfg)


if __name__ == "__main__":
    m_ch, s_ch = 1, 1          # Conv2d(m, s, 1, stride=1, padding=1)
    N, H, W = 2, 16, 16

    key = jax.random.PRNGKey(0)
    kx, kw, kb = jax.random.split(key, 3)

    # deterministic parameter init (shapes match nn.Conv2d(m, s, 1))
    x = jax.random.normal(kx, (N, m_ch, H, W), dtype=jnp.float32)
    bound = 1.0 / (m_ch * 1 * 1) ** 0.5
    weight = jax.random.uniform(kw, (s_ch, m_ch, 1, 1), jnp.float32, -bound, bound)
    bias = jax.random.uniform(kb, (s_ch,), jnp.float32, -bound, bound)

    # min_pallas_elems=0 forces the Pallas path even at this demo size.
    out = conv1x1_pad_tanh(x, weight, bias, padding=1, min_pallas_elems=0)
    out = jax.block_until_ready(out)

    # reference check in plain JAX (materialized zero pad + einsum conv)
    xp = jnp.pad(x, ((0, 0), (0, 0), (1, 1), (1, 1)))
    ref = jnp.tanh(
        jnp.einsum("nchw,oc->nohw", xp, weight.reshape(s_ch, m_ch))
        + bias.reshape(1, s_ch, 1, 1)
    )
    assert out.shape == (N, s_ch, H + 2, W + 2), out.shape
    assert jnp.allclose(out, ref, atol=1e-5, rtol=1e-5), float(jnp.abs(out - ref).max())

    print("KERNEL_OK")
</pallas_src>

<mosaic_0001>
module attributes {stable_mosaic.version = 11 : i64} {
  func.func @affine_tanh_kernel(%arg0: i32, %arg1: memref<1xf32, #tpu.memory_space<smem>>, %arg2: memref<1xf32, #tpu.memory_space<smem>>, %arg3: memref<8x128xf32, #tpu.memory_space<vmem>>, %arg4: memref<8x128xf32, #tpu.memory_space<vmem>>) attributes {dimension_semantics = [#tpu.dimension_semantics<parallel>], iteration_bounds = array<i64: 1>, scalar_prefetch = 0 : i64, scratch_operands = 0 : i64, tpu.core_type = #tpu.core_type<tc>, window_params = [{transform_indices = @transform_0, window_bounds = array<i64: 1>}, {transform_indices = @transform_1, window_bounds = array<i64: 1>}, {transform_indices = @transform_2, window_bounds = array<i64: 8, 128>}, {transform_indices = @transform_3, window_bounds = array<i64: 8, 128>}]} {
    %c0 = arith.constant 0 : index
    %c0_0 = arith.constant 0 : index
    %0 = vector.load %arg3[%c0, %c0_0] : memref<8x128xf32, #tpu.memory_space<vmem>>, vector<8x128xf32>
    %c0_1 = arith.constant 0 : index
    %1 = memref.load %arg1[%c0_1] : memref<1xf32, #tpu.memory_space<smem>>
    %2 = vector.broadcast %1 : f32 to vector<8x128xf32>
    %3 = arith.mulf %0, %2 : vector<8x128xf32>
    %c0_2 = arith.constant 0 : index
    %4 = memref.load %arg2[%c0_2] : memref<1xf32, #tpu.memory_space<smem>>
    %5 = vector.broadcast %4 : f32 to vector<8x128xf32>
    %6 = arith.addf %3, %5 : vector<8x128xf32>
    %7 = math.tanh %6 : vector<8x128xf32>
    %c0_3 = arith.constant 0 : index
    %c0_4 = arith.constant 0 : index
    %8 = vector.load %arg4[%c0_3, %c0_4] : memref<8x128xf32, #tpu.memory_space<vmem>>, vector<8x128xf32>
    tpu.vector_store %arg4[%c0_3, %c0_4], %7 {strides = array<i32>} : memref<8x128xf32, #tpu.memory_space<vmem>>, vector<8x128xf32>,
    return
  }
  func.func @transform_0(%arg0: i32) -> i32 {
    %c0_i32 = arith.constant 0 : i32
    %c0_i32_0 = arith.constant 0 : i32
    return %c0_i32 : i32
  }
  func.func @transform_1(%arg0: i32) -> i32 {
    %c0_i32 = arith.constant 0 : i32
    %c0_i32_0 = arith.constant 0 : i32
    return %c0_i32 : i32
  }
  func.func @transform_2(%arg0: i32) -> (i32, i32) {
    %c0_i32 = arith.constant 0 : i32
    %c0_i32_0 = arith.constant 0 : i32
    return %arg0, %c0_i32 : i32, i32
  }
  func.func @transform_3(%arg0: i32) -> (i32, i32) {
    %c0_i32 = arith.constant 0 : i32
    %c0_i32_0 = arith.constant 0 : i32
    return %arg0, %c0_i32 : i32, i32
  }
}

</mosaic_0001>

<llo_original>
// kernel: tpu_custom_call.1
$region0: #{tpu_custom_call.1}
  #allocation0 [shape = 'u32[]', space=smem, size = 0x4, offset = 0x4, fixed_abs, tag = 'smem constant byte address 0x4 - core index']
  #allocation1 [shape = 'u32[144,128]{1,0:T(1,128)}', space=vmem, size = 0x12000, scoped, tag = 'internal scratch']
  #allocation2 [shape = 'f32[1]{0:T(128)S(6)}', space=smem, size = 0x200, scoped, tag = 'scoped memory for tpu_custom_call.1']
  #allocation3 [shape = 'f32[1]{0:T(128)S(6)}', space=smem, size = 0x200, scoped, tag = 'scoped memory for tpu_custom_call.1']
  %s0 = inlined_call_operand.<no memory space> [shape: f32[1], index: 0, kind: input, shape index: {}]
  %s1 = inlined_call_operand.<no memory space> [shape: f32[1], index: 1, kind: input, shape index: {}]
  %s2 = inlined_call_operand.hbm [shape: f32[8,128], index: 2, kind: input, shape index: {}]
  %s3 = inlined_call_operand.hbm [shape: f32[8,128], index: 3, kind: output, shape index: {}]
  %s4 = sld [smem:[#allocation0]]
  $region26: #{tpu_custom_call.1} parent=0
    _
  %s6 = ssub.s32 1, %s4
  %s7 = scalar_select 0, %s6, %s4
  %8 = sst [smem:[#allocation2]] %s0
  %9 = sst [smem:[#allocation3]] %s1
  $region1: #{tpu_custom_call.1} parent=0
    #allocation4 [shape = 'u8[4096]{0}', space=vmem, size = 0x1000, scoped, tag = 'input window, operand 2, single buffered']
    #allocation5 [shape = 's32[1]{0}', space=sflag, size = 0x4, scoped, tag = 'scoped memory for tpu_custom_call.1']
    #allocation6 [shape = 's32[1]{0}', space=sflag, size = 0x4, scoped, tag = 'scoped memory for tpu_custom_call.1']
    #allocation7 [shape = 'u8[4096]{0}', space=vmem, size = 0x1000, scoped, tag = 'output window, operand 0, single buffered']
    %10 = vsyncpa [#allocation5], 0
    %11 = vsyncpa [#allocation6], 0
    // Predicated region
    $region2: #{tpu_custom_call.1} parent=1 // pred_check
      _
    $region3: #{tpu_custom_call.1} parent=1 // pred_check_branch
      %13 = sbr.rel (0) target = $region5
    $region4: #{tpu_custom_call.1} parent=1 // pred_region
      _
    $region5: #{tpu_custom_call.1} parent=1 // pred_fallthru
      _
    // Predicated region
    $region6: #{tpu_custom_call.1} parent=1 // pred_check
      _
    $region7: #{tpu_custom_call.1} parent=1 // pred_check_branch
      %15 = sbr.rel (0) target = $region9
    $region8: #{tpu_custom_call.1} parent=1 // pred_region
      _
    $region9: #{tpu_custom_call.1} parent=1 // pred_fallthru
      _
    // Predicated region
    $region10: #{tpu_custom_call.1} parent=1 // pred_check
      _
    $region11: #{tpu_custom_call.1} parent=1 // pred_check_branch
      %17 = sbr.rel (0) target = $region13
    $region12: #{tpu_custom_call.1} parent=1 // pred_region
      %s19 = ssub.s32 128, 128
      %20 = vsyncadd [#allocation5], %s19
      %s22 = sshll.u32 [#allocation4], 4
      %s23 = int_to_ptr.vmem [resolvable:$true] %s22
      %25 = dma.hbm_to_vmem [thread:$0]  %s2, 128, %s23, [#allocation5]
    $region13: #{tpu_custom_call.1} parent=1 // pred_fallthru
      _
    // Predicated region
    $region14: #{tpu_custom_call.1} parent=1 // pred_check
      _
    $region15: #{tpu_custom_call.1} parent=1 // pred_check_branch
      %27 = sbr.rel (0) target = $region17
    $region16: #{tpu_custom_call.1} parent=1 // pred_region
      %28 = dma.done [#allocation5], 128
    $region17: #{tpu_custom_call.1} parent=1 // pred_fallthru
      _
    %v29 = vld [vmem:[#allocation4] sm:$0xff]
    %s30 = sld [smem:[#allocation2]]
    %v31 = vstv %s30
    %v32 = vmul.f32 %v29, %v31
    %s33 = sld [smem:[#allocation3]]
    %v34 = vstv %s33
    %v35 = vadd.f32 %v32, %v34
    %v36 = vtanh.pop %v35
    %37 = vst [vmem:[#allocation7] sm:$0xff] %v36
    // Predicated region
    $region18: #{tpu_custom_call.1} parent=1 // pred_check
      _
    $region19: #{tpu_custom_call.1} parent=1 // pred_check_branch
      %39 = sbr.rel (0) target = $region21
    $region20: #{tpu_custom_call.1} parent=1 // pred_region
      %s41 = ssub.s32 128, 128
      %42 = vsyncadd [#allocation6], %s41
      %s44 = sshll.u32 [#allocation7], 4
      %s45 = int_to_ptr.vmem [resolvable:$true] %s44
      %47 = dma.vmem_to_hbm [thread:$0]  %s45, 128, %s3, [#allocation6]
    $region21: #{tpu_custom_call.1} parent=1 // pred_fallthru
      _
    // Predicated region
    $region22: #{tpu_custom_call.1} parent=1 // pred_check
      _
    $region23: #{tpu_custom_call.1} parent=1 // pred_check_branch
      %49 = sbr.rel (0) target = $region25
    $region24: #{tpu_custom_call.1} parent=1 // pred_region
      %50 = dma.done [#allocation6], 128
    $region25: #{tpu_custom_call.1} parent=1 // pred_fallthru
      _
    %51 = vsyncpa [#allocation5], 1
    %52 = vsyncpa [#allocation6], 1

</llo_original>
